<compile_context>
chip_gen: v5e
topology: v5e:2x2
jax: 0.10.0
libtpu: 0.0.40
codegen_flags: <defaults>
</compile_context>

<pallas_src>
import jax
import jax.numpy as jnp
from jax.experimental import pallas as pl
from jax.experimental.pallas import tpu as pltpu

NEG_SLOPE = 0.2
LATENT_DIM = 10
HIDDEN_UNITS = 128


def _round_up(x, m):
    return ((x + m - 1) // m) * m


def _leaky_relu(x, neg_slope):
    return jnp.where(x >= 0.0, x, neg_slope * x)


def mlp_kernel(z_ref, w1_ref, b1_ref, w2_ref, b2_ref, w3_ref, b3_ref, out_ref):
    """One batch tile of the MLP.

    z_ref  : [latent, TB] bf16      w1_ref : [H, latent] bf16   b1_ref : [H,1] f32
    w2_ref : [H, H] bf16            b2_ref : [H, 1] f32
    w3_ref : [H, 1] f32  (layer-3 column; VPU/XLU path, no MXU push)
    b3_ref : (1,) f32 in SMEM
    out_ref: [2, TB] f32  (row 0 = logit, row 1 = sigmoid(logit))
    """
    z = z_ref[...]                                                  # bf16

    # Layer 1: MXU (K = latent), f32 accumulate.
    h = jnp.dot(w1_ref[...], z, preferred_element_type=jnp.float32)
    h = _leaky_relu(h + b1_ref[...], NEG_SLOPE)                     # f32 [H, TB]

    # Layer 2: MXU 128x128, f32 accumulate.
    h = jnp.dot(w2_ref[...], h.astype(jnp.bfloat16),
                preferred_element_type=jnp.float32)
    h = _leaky_relu(h + b2_ref[...], NEG_SLOPE)                     # f32 [H, TB]

    # Layer 3: out_features == 1 -> VPU multiply + sublane (XLU) reduce;
    # avoids a third full-TB-column MXU weight push per tile.
    logit = jnp.sum(w3_ref[...] * h, axis=0, keepdims=True) + b3_ref[0]  # [1, TB]

    out_ref[...] = jnp.concatenate([logit, jax.nn.sigmoid(logit)], axis=0)


def mlp_forward(z, params, mode="train", block_b=4096):
    """Wrapper: lays data out lane-dense, tiles the batch, calls the kernel."""
    w1, b1, w2, b2, w3, b3 = params
    B, latent = z.shape
    H = w1.shape[0]

    # Batch tile: multiple of 128 (lane-dense), no larger than needed.
    b_pad128 = _round_up(B, 128)
    tb = min(_round_up(block_b, 128), b_pad128)
    # Keep >= 2 grid steps whenever the padded batch allows it so the
    # "parallel" batch axis can span both TensorCores on v7x.
    if b_pad128 >= 256:
        tb = min(tb, max(128, (b_pad128 // 2) // 128 * 128))
    b_pad = _round_up(B, tb)
    grid = (b_pad // tb,)

    # Pad batch and transpose to [latent, B_pad]; bf16 halves z DMA bytes.
    z_t = jnp.pad(z.astype(jnp.bfloat16), ((0, b_pad - B), (0, 0))).T

    flops = 2 * b_pad * (latent * H + H * H + H)
    bytes_accessed = (z_t.size * 2
                      + (H * latent + H * H) * 2      # bf16 weights
                      + (3 * H + 1) * 4               # f32 w3 column + biases
                      + 2 * b_pad * 4)                # packed output

    out = pl.pallas_call(
        mlp_kernel,
        grid=grid,
        in_specs=[
            pl.BlockSpec((latent, tb), lambda i: (0, i)),       # z tile
            pl.BlockSpec((H, latent), lambda i: (0, 0)),        # W1 (resident)
            pl.BlockSpec((H, 1), lambda i: (0, 0)),             # b1
            pl.BlockSpec((H, H), lambda i: (0, 0)),             # W2
            pl.BlockSpec((H, 1), lambda i: (0, 0)),             # b2
            pl.BlockSpec((H, 1), lambda i: (0, 0)),             # W3 column
            pl.BlockSpec(memory_space=pltpu.MemorySpace.SMEM),  # b3 scalar
        ],
        out_specs=pl.BlockSpec((2, tb), lambda i: (0, i)),      # packed logit/prob
        out_shape=jax.ShapeDtypeStruct((2, b_pad), jnp.float32),
        compiler_params=pltpu.CompilerParams(
            dimension_semantics=("parallel",),
            vmem_limit_bytes=48 * 1024 * 1024),
        cost_estimate=pl.CostEstimate(
            flops=int(flops), transcendentals=int(b_pad),
            bytes_accessed=int(bytes_accessed)),
    )(z_t, w1, b1, w2, b2, w3, b3)

    logit = out[0, :B].reshape(B, 1)
    prob = out[1, :B].reshape(B, 1)

    if mode == "test":
        # softmax over dim=1 of a [B, 1] tensor -> all ones (glue).
        return jax.nn.softmax(logit, axis=1)
    elif mode == "train":
        return logit, prob
    else:
        raise ValueError(f"unknown mode: {mode}")


def init_params(key, latent_dim=LATENT_DIM, hidden_units=HIDDEN_UNITS):
    """Deterministic synthetic init (Kaiming-ish). W1/W2 stored [out, in] bf16
    (MXU operands); W3 stored as an [H, 1] f32 column (VPU path); biases f32."""
    k1, k2, k3 = jax.random.split(key, 3)
    w1 = (jax.random.normal(k1, (hidden_units, latent_dim), jnp.float32)
          * (2.0 / latent_dim) ** 0.5).astype(jnp.bfloat16)
    b1 = jnp.zeros((hidden_units, 1), jnp.float32)
    w2 = (jax.random.normal(k2, (hidden_units, hidden_units), jnp.float32)
          * (2.0 / hidden_units) ** 0.5).astype(jnp.bfloat16)
    b2 = jnp.zeros((hidden_units, 1), jnp.float32)
    w3 = (jax.random.normal(k3, (hidden_units, 1), jnp.float32)
          * (2.0 / hidden_units) ** 0.5)
    b3 = jnp.zeros((1,), jnp.float32)
    return (w1, b1, w2, b2, w3, b3)


def mlp_reference(z, params):
    """Pure-JAX reference, precision-matched to the kernel (bf16 dot operands
    for layers 1-2 with f32 accumulate; layer 3 fully f32)."""
    w1, b1, w2, b2, w3, b3 = params
    h = jnp.dot(z.astype(jnp.bfloat16), w1.T,
                preferred_element_type=jnp.float32)
    h = _leaky_relu(h + b1.reshape(1, -1), NEG_SLOPE)
    h = jnp.dot(h.astype(jnp.bfloat16), w2.T,
                preferred_element_type=jnp.float32)
    h = _leaky_relu(h + b2.reshape(1, -1), NEG_SLOPE)
    logit = h @ w3 + b3.reshape(1, 1)                    # f32 [B, 1]
    return logit, jax.nn.sigmoid(logit)


if __name__ == "__main__":
    key = jax.random.PRNGKey(0)
    kz, kp, kz2, kz3 = jax.random.split(key, 4)

    params = init_params(kp)

    # --- small batch (B=2): single grid step, padded batch sliced off ---
    B = 2
    z = jax.random.normal(kz, (B, LATENT_DIM), jnp.float32)

    logit, prob = jax.block_until_ready(mlp_forward(z, params, mode="train"))
    sm = jax.block_until_ready(mlp_forward(z, params, mode="test"))

    ref_logit, ref_prob = mlp_reference(z, params)
    assert logit.shape == (B, 1) and prob.shape == (B, 1) and sm.shape == (B, 1)
    assert jnp.allclose(logit, ref_logit, atol=1e-3, rtol=1e-3)
    assert jnp.allclose(prob, ref_prob, atol=1e-3, rtol=1e-3)
    assert jnp.allclose(sm, jnp.ones((B, 1), jnp.float32), atol=1e-6)

    # --- B not a multiple of the tile: grid > 1 + batch padding ---
    B2 = 300
    z2 = jax.random.normal(kz2, (B2, LATENT_DIM), jnp.float32)
    logit2, prob2 = jax.block_until_ready(
        mlp_forward(z2, params, mode="train", block_b=128))
    ref_logit2, ref_prob2 = mlp_reference(z2, params)
    assert logit2.shape == (B2, 1) and prob2.shape == (B2, 1)
    assert jnp.allclose(logit2, ref_logit2, atol=1e-3, rtol=1e-3)
    assert jnp.allclose(prob2, ref_prob2, atol=1e-3, rtol=1e-3)

    # --- mid-size batch, default tile: exercises the >=2-step grid split ---
    B3 = 1000
    z3 = jax.random.normal(kz3, (B3, LATENT_DIM), jnp.float32)
    logit3, prob3 = jax.block_until_ready(
        mlp_forward(z3, params, mode="train"))
    ref_logit3, ref_prob3 = mlp_reference(z3, params)
    assert logit3.shape == (B3, 1) and prob3.shape == (B3, 1)
    assert jnp.allclose(logit3, ref_logit3, atol=1e-3, rtol=1e-3)
    assert jnp.allclose(prob3, ref_prob3, atol=1e-3, rtol=1e-3)

    print("KERNEL_OK")
</pallas_src>

<mosaic_0001>
module attributes {stable_mosaic.version = 11 : i64} {
  func.func @mlp_kernel(%arg0: i32, %arg1: memref<10x128xbf16, #tpu.memory_space<vmem>>, %arg2: memref<128x10xbf16, #tpu.memory_space<vmem>>, %arg3: memref<128x1xf32, #tpu.memory_space<vmem>>, %arg4: memref<128x128xbf16, #tpu.memory_space<vmem>>, %arg5: memref<128x1xf32, #tpu.memory_space<vmem>>, %arg6: memref<128x1xf32, #tpu.memory_space<vmem>>, %arg7: memref<1xf32, #tpu.memory_space<smem>>, %arg8: memref<2x128xf32, #tpu.memory_space<vmem>>) attributes {dimension_semantics = [#tpu.dimension_semantics<parallel>], iteration_bounds = array<i64: 1>, scalar_prefetch = 0 : i64, scratch_operands = 0 : i64, tpu.core_type = #tpu.core_type<tc>, window_params = [{transform_indices = @transform_0, window_bounds = array<i64: 10, 128>}, {pipeline_mode = #tpu.pipeline_mode<synchronous>, transform_indices = @transform_1, window_bounds = array<i64: 128, 10>}, {pipeline_mode = #tpu.pipeline_mode<synchronous>, transform_indices = @transform_2, window_bounds = array<i64: 128, 1>}, {pipeline_mode = #tpu.pipeline_mode<synchronous>, transform_indices = @transform_3, window_bounds = array<i64: 128, 128>}, {pipeline_mode = #tpu.pipeline_mode<synchronous>, transform_indices = @transform_4, window_bounds = array<i64: 128, 1>}, {pipeline_mode = #tpu.pipeline_mode<synchronous>, transform_indices = @transform_5, window_bounds = array<i64: 128, 1>}, {transform_indices = @transform_6, window_bounds = array<i64: 1>}, {transform_indices = @transform_7, window_bounds = array<i64: 2, 128>}]} {
    %c0 = arith.constant 0 : index
    %c0_0 = arith.constant 0 : index
    %0 = vector.load %arg1[%c0, %c0_0] : memref<10x128xbf16, #tpu.memory_space<vmem>>, vector<10x128xbf16>
    %c0_1 = arith.constant 0 : index
    %c0_2 = arith.constant 0 : index
    %1 = vector.load %arg2[%c0_1, %c0_2] : memref<128x10xbf16, #tpu.memory_space<vmem>>, vector<128x10xbf16>
    %cst = arith.constant dense<0.000000e+00> : vector<128x128xf32>
    %2 = tpu.matmul %1, %0, %cst {dimension_numbers = #tpu.dot_dimension_numbers<[1], [0], [0], [1], [0, 0, 1, 1], [], []>} : vector<128x10xbf16>, vector<10x128xbf16>, vector<128x128xf32> -> vector<128x128xf32>
    %c0_3 = arith.constant 0 : index
    %c0_4 = arith.constant 0 : index
    %3 = vector.load %arg3[%c0_3, %c0_4] : memref<128x1xf32, #tpu.memory_space<vmem>>, vector<128x1xf32>
    %4 = vector.broadcast %3 : vector<128x1xf32> to vector<128x128xf32>
    %5 = arith.addf %2, %4 : vector<128x128xf32>
    %cst_5 = arith.constant 0.000000e+00 : f32
    %6 = vector.broadcast %cst_5 : f32 to vector<128x128xf32>
    %7 = arith.cmpf oge, %5, %6 : vector<128x128xf32>
    %cst_6 = arith.constant 2.000000e-01 : f32
    %8 = vector.broadcast %cst_6 : f32 to vector<128x128xf32>
    %9 = arith.mulf %8, %5 : vector<128x128xf32>
    %10 = arith.select %7, %5, %9 : vector<128x128xi1>, vector<128x128xf32>
    %c0_7 = arith.constant 0 : index
    %c0_8 = arith.constant 0 : index
    %11 = vector.load %arg4[%c0_7, %c0_8] : memref<128x128xbf16, #tpu.memory_space<vmem>>, vector<128x128xbf16>
    %12 = arith.truncf %10 : vector<128x128xf32> to vector<128x128xbf16>
    %cst_9 = arith.constant dense<0.000000e+00> : vector<128x128xf32>
    %13 = tpu.matmul %11, %12, %cst_9 {dimension_numbers = #tpu.dot_dimension_numbers<[1], [0], [0], [1], [0, 0, 1, 1], [], []>} : vector<128x128xbf16>, vector<128x128xbf16>, vector<128x128xf32> -> vector<128x128xf32>
    %c0_10 = arith.constant 0 : index
    %c0_11 = arith.constant 0 : index
    %14 = vector.load %arg5[%c0_10, %c0_11] : memref<128x1xf32, #tpu.memory_space<vmem>>, vector<128x1xf32>
    %15 = vector.broadcast %14 : vector<128x1xf32> to vector<128x128xf32>
    %16 = arith.addf %13, %15 : vector<128x128xf32>
    %cst_12 = arith.constant 0.000000e+00 : f32
    %17 = vector.broadcast %cst_12 : f32 to vector<128x128xf32>
    %18 = arith.cmpf oge, %16, %17 : vector<128x128xf32>
    %cst_13 = arith.constant 2.000000e-01 : f32
    %19 = vector.broadcast %cst_13 : f32 to vector<128x128xf32>
    %20 = arith.mulf %19, %16 : vector<128x128xf32>
    %21 = arith.select %18, %16, %20 : vector<128x128xi1>, vector<128x128xf32>
    %c0_14 = arith.constant 0 : index
    %c0_15 = arith.constant 0 : index
    %22 = vector.load %arg6[%c0_14, %c0_15] : memref<128x1xf32, #tpu.memory_space<vmem>>, vector<128x1xf32>
    %23 = vector.broadcast %22 : vector<128x1xf32> to vector<128x128xf32>
    %24 = arith.mulf %23, %21 : vector<128x128xf32>
    %cst_16 = arith.constant dense<0.000000e+00> : vector<128xf32>
    %25 = vector.multi_reduction <add>, %24, %cst_16 [0] : vector<128x128xf32> to vector<128xf32>
    %26 = vector.shape_cast %25 : vector<128xf32> to vector<1x128xf32>
    %c0_17 = arith.constant 0 : index
    %27 = memref.load %arg7[%c0_17] : memref<1xf32, #tpu.memory_space<smem>>
    %28 = vector.broadcast %27 : f32 to vector<1x128xf32>
    %29 = arith.addf %26, %28 : vector<1x128xf32>
    %30 = arith.negf %29 : vector<1x128xf32>
    %31 = math.exp %30 : vector<1x128xf32>
    %cst_18 = arith.constant 1.000000e+00 : f32
    %32 = vector.broadcast %cst_18 : f32 to vector<1x128xf32>
    %33 = arith.addf %32, %31 : vector<1x128xf32>
    %34 = arith.divf %32, %33 : vector<1x128xf32>
    %35 = tpu.concatenate %29, %34 in 0 : vector<1x128xf32>, vector<1x128xf32> -> vector<2x128xf32>
    %c0_19 = arith.constant 0 : index
    %c0_20 = arith.constant 0 : index
    %36 = vector.load %arg8[%c0_19, %c0_20] : memref<2x128xf32, #tpu.memory_space<vmem>>, vector<2x128xf32>
    tpu.vector_store %arg8[%c0_19, %c0_20], %35 {strides = array<i32>} : memref<2x128xf32, #tpu.memory_space<vmem>>, vector<2x128xf32>,
    return
  }
  func.func @transform_0(%arg0: i32) -> (i32, i32) {
    %c0_i32 = arith.constant 0 : i32
    %c0_i32_0 = arith.constant 0 : i32
    return %c0_i32, %arg0 : i32, i32
  }
  func.func @transform_1(%arg0: i32) -> (i32, i32) {
    %c0_i32 = arith.constant 0 : i32
    %c0_i32_0 = arith.constant 0 : i32
    %c0_i32_1 = arith.constant 0 : i32
    return %c0_i32, %c0_i32_0 : i32, i32
  }
  func.func @transform_2(%arg0: i32) -> (i32, i32) {
    %c0_i32 = arith.constant 0 : i32
    %c0_i32_0 = arith.constant 0 : i32
    %c0_i32_1 = arith.constant 0 : i32
    return %c0_i32, %c0_i32_0 : i32, i32
  }
  func.func @transform_3(%arg0: i32) -> (i32, i32) {
    %c0_i32 = arith.constant 0 : i32
    %c0_i32_0 = arith.constant 0 : i32
    %c0_i32_1 = arith.constant 0 : i32
    return %c0_i32, %c0_i32_0 : i32, i32
  }
  func.func @transform_4(%arg0: i32) -> (i32, i32) {
    %c0_i32 = arith.constant 0 : i32
    %c0_i32_0 = arith.constant 0 : i32
    %c0_i32_1 = arith.constant 0 : i32
    return %c0_i32, %c0_i32_0 : i32, i32
  }
  func.func @transform_5(%arg0: i32) -> (i32, i32) {
    %c0_i32 = arith.constant 0 : i32
    %c0_i32_0 = arith.constant 0 : i32
    %c0_i32_1 = arith.constant 0 : i32
    return %c0_i32, %c0_i32_0 : i32, i32
  }
  func.func @transform_6(%arg0: i32) -> i32 {
    %c0_i32 = arith.constant 0 : i32
    %c0_i32_0 = arith.constant 0 : i32
    return %c0_i32 : i32
  }
  func.func @transform_7(%arg0: i32) -> (i32, i32) {
    %c0_i32 = arith.constant 0 : i32
    %c0_i32_0 = arith.constant 0 : i32
    return %c0_i32, %arg0 : i32, i32
  }
}

</mosaic_0001>

<llo_original>
// kernel: tpu_custom_call.1
$region0: #{tpu_custom_call.1}
  #allocation0 [shape = 'u32[]', space=smem, size = 0x4, offset = 0x4, fixed_abs, tag = 'smem constant byte address 0x4 - core index']
  #allocation1 [shape = 'u32[72,128]{1,0:T(1,128)}', space=vmem, size = 0x9000, scoped, tag = 'internal scratch']
  #allocation2 [shape = 'f32[1]{0:T(128)S(6)}', space=smem, size = 0x200, scoped, tag = 'scoped memory for tpu_custom_call.1']
  %s0 = inlined_call_operand.vmem [shape: bf16[10,128], index: 0, kind: input, shape index: {}]
  %s1 = inlined_call_operand.vmem [shape: bf16[128,10], index: 1, kind: input, shape index: {}]
  %s2 = inlined_call_operand.vmem [shape: f32[128,1], index: 2, kind: input, shape index: {}]
  %s3 = inlined_call_operand.vmem [shape: bf16[128,128], index: 3, kind: input, shape index: {}]
  %s4 = inlined_call_operand.vmem [shape: f32[128,1], index: 4, kind: input, shape index: {}]
  %s5 = inlined_call_operand.vmem [shape: f32[128,1], index: 5, kind: input, shape index: {}]
  %s6 = inlined_call_operand.<no memory space> [shape: f32[1], index: 6, kind: input, shape index: {}]
  %s7 = inlined_call_operand.hbm [shape: f32[2,128], index: 7, kind: output, shape index: {}]
  %s8 = sld [smem:[#allocation0]]
  $region38: #{tpu_custom_call.1} parent=0
    _
  %s10 = ssub.s32 1, %s8
  %s11 = scalar_select 0, %s10, %s8
  %12 = sst [smem:[#allocation2]] %s6
  $region1: #{tpu_custom_call.1} parent=0
    #allocation3 [shape = 'u8[1024]{0}', space=vmem, size = 0x400, scoped, tag = 'output window, operand 0, single buffered']
    #allocation4 [shape = 's32[1]{0}', space=sflag, size = 0x4, scoped, tag = 'scoped memory for tpu_custom_call.1']
    %13 = vsyncpa [#allocation4], 0
    // Predicated region
    $region2: #{tpu_custom_call.1} parent=1 // pred_check
      _
    $region3: #{tpu_custom_call.1} parent=1 // pred_check_branch
      %15 = sbr.rel (0) target = $region5
    $region4: #{tpu_custom_call.1} parent=1 // pred_region
      _
    $region5: #{tpu_custom_call.1} parent=1 // pred_fallthru
      _
    // Predicated region
    $region6: #{tpu_custom_call.1} parent=1 // pred_check
      _
    $region7: #{tpu_custom_call.1} parent=1 // pred_check_branch
      %17 = sbr.rel (0) target = $region9
    $region8: #{tpu_custom_call.1} parent=1 // pred_region
      _
    $region9: #{tpu_custom_call.1} parent=1 // pred_fallthru
      _
    // Predicated region
    $region10: #{tpu_custom_call.1} parent=1 // pred_check
      _
    $region11: #{tpu_custom_call.1} parent=1 // pred_check_branch
      %19 = sbr.rel (0) target = $region13
    $region12: #{tpu_custom_call.1} parent=1 // pred_region
      _
    $region13: #{tpu_custom_call.1} parent=1 // pred_fallthru
      _
    // Predicated region
    $region14: #{tpu_custom_call.1} parent=1 // pred_check
      _
    $region15: #{tpu_custom_call.1} parent=1 // pred_check_branch
      %21 = sbr.rel (0) target = $region17
    $region16: #{tpu_custom_call.1} parent=1 // pred_region
      _
    $region17: #{tpu_custom_call.1} parent=1 // pred_fallthru
      _
    // Predicated region
    $region18: #{tpu_custom_call.1} parent=1 // pred_check
      _
    $region19: #{tpu_custom_call.1} parent=1 // pred_check_branch
      %23 = sbr.rel (0) target = $region21
    $region20: #{tpu_custom_call.1} parent=1 // pred_region
      _
    $region21: #{tpu_custom_call.1} parent=1 // pred_fallthru
      _
    // Predicated region
    $region22: #{tpu_custom_call.1} parent=1 // pred_check
      _
    $region23: #{tpu_custom_call.1} parent=1 // pred_check_branch
      %25 = sbr.rel (0) target = $region25
    $region24: #{tpu_custom_call.1} parent=1 // pred_region
      _
    $region25: #{tpu_custom_call.1} parent=1 // pred_fallthru
      _
    // Predicated region
    $region26: #{tpu_custom_call.1} parent=1 // pred_check
      _
    $region27: #{tpu_custom_call.1} parent=1 // pred_check_branch
      %27 = sbr.rel (0) target = $region29
    $region28: #{tpu_custom_call.1} parent=1 // pred_region
      _
    $region29: #{tpu_custom_call.1} parent=1 // pred_fallthru
      _
    %v29 = vld [vmem:[%s0] sm:$0xf]
    %v30 = vld [vmem:[%s0 + $0x4] sm:$0x1]
    %v31 = vld [vmem:[%s1] sm:$0xf]
    %v32 = vld [vmem:[%s1 + $0x4] sm:$0xf]
    %v33 = vld [vmem:[%s1 + $0x8] sm:$0xf]
    %v34 = vld [vmem:[%s1 + $0xc] sm:$0xf]
    %v35 = vld [vmem:[%s1 + $0x10] sm:$0xf]
    %v36 = vld [vmem:[%s1 + $0x14] sm:$0xf]
    %v37 = vld [vmem:[%s1 + $0x18] sm:$0xf]
    %v38 = vld [vmem:[%s1 + $0x1c] sm:$0xf]
    %v39 = vld [vmem:[%s1 + $0x20] sm:$0xf]
    %v40 = vld [vmem:[%s1 + $0x24] sm:$0xf]
    %v41 = vld [vmem:[%s1 + $0x28] sm:$0xf]
    %v42 = vld [vmem:[%s1 + $0x2c] sm:$0xf]
    %v43 = vld [vmem:[%s1 + $0x30] sm:$0xf]
    %v44 = vld [vmem:[%s1 + $0x34] sm:$0xf]
    %v45 = vld [vmem:[%s1 + $0x38] sm:$0xf]
    %v46 = vld [vmem:[%s1 + $0x3c] sm:$0xf]
    %v47 = vld [vmem:[%s2] sm:$0xff]
    %v48 = vld [vmem:[%s2 + $0x8] sm:$0xff]
    %v49 = vld [vmem:[%s2 + $0x10] sm:$0xff]
    %v50 = vld [vmem:[%s2 + $0x18] sm:$0xff]
    %v51 = vld [vmem:[%s2 + $0x20] sm:$0xff]
    %v52 = vld [vmem:[%s2 + $0x28] sm:$0xff]
    %v53 = vld [vmem:[%s2 + $0x30] sm:$0xff]
    %v54 = vld [vmem:[%s2 + $0x38] sm:$0xff]
    %v55 = vld [vmem:[%s2 + $0x40] sm:$0xff]
    %v56 = vld [vmem:[%s2 + $0x48] sm:$0xff]
    %v57 = vld [vmem:[%s2 + $0x50] sm:$0xff]
    %v58 = vld [vmem:[%s2 + $0x58] sm:$0xff]
    %v59 = vld [vmem:[%s2 + $0x60] sm:$0xff]
    %v60 = vld [vmem:[%s2 + $0x68] sm:$0xff]
    %v61 = vld [vmem:[%s2 + $0x70] sm:$0xff]
    %v62 = vld [vmem:[%s2 + $0x78] sm:$0xff]
    %64 = vset.pattern.permute.xlu0 0
    %65 = vperm.xlu0 %64, %v47
    %v66 = vpop.permute.xlu0 %65
    %69 = vset.pattern.permute.xlu0 0
    %70 = vperm.xlu0 %69, %v48
    %v71 = vpop.permute.xlu0 %70
    %74 = vset.pattern.permute.xlu0 0
    %75 = vperm.xlu0 %74, %v49
    %v76 = vpop.permute.xlu0 %75
    %79 = vset.pattern.permute.xlu0 0
    %80 = vperm.xlu0 %79, %v50
    %v81 = vpop.permute.xlu0 %80
    %84 = vset.pattern.permute.xlu0 0
    %85 = vperm.xlu0 %84, %v51
    %v86 = vpop.permute.xlu0 %85
    %89 = vset.pattern.permute.xlu0 0
    %90 = vperm.xlu0 %89, %v52
    %v91 = vpop.permute.xlu0 %90
    %94 = vset.pattern.permute.xlu0 0
    %95 = vperm.xlu0 %94, %v53
    %v96 = vpop.permute.xlu0 %95
    %99 = vset.pattern.permute.xlu0 0
    %100 = vperm.xlu0 %99, %v54
    %v101 = vpop.permute.xlu0 %100
    %104 = vset.pattern.permute.xlu0 0
    %105 = vperm.xlu0 %104, %v55
    %v106 = vpop.permute.xlu0 %105
    %109 = vset.pattern.permute.xlu0 0
    %110 = vperm.xlu0 %109, %v56
    %v111 = vpop.permute.xlu0 %110
    %114 = vset.pattern.permute.xlu0 0
    %115 = vperm.xlu0 %114, %v57
    %v116 = vpop.permute.xlu0 %115
    %119 = vset.pattern.permute.xlu0 0
    %120 = vperm.xlu0 %119, %v58
    %v121 = vpop.permute.xlu0 %120
    %124 = vset.pattern.permute.xlu0 0
    %125 = vperm.xlu0 %124, %v59
    %v126 = vpop.permute.xlu0 %125
    %129 = vset.pattern.permute.xlu0 0
    %130 = vperm.xlu0 %129, %v60
    %v131 = vpop.permute.xlu0 %130
    %134 = vset.pattern.permute.xlu0 0
    %135 = vperm.xlu0 %134, %v61
    %v136 = vpop.permute.xlu0 %135
    %139 = vset.pattern.permute.xlu0 0
    %140 = vperm.xlu0 %139, %v62
    %v141 = vpop.permute.xlu0 %140
    %v159 = vunpack.c.l.b16 %v31
    %v160 = vunpack.c.l.b16 %v32
    %v161 = vunpack.c.l.b16 %v33
    %v162 = vunpack.c.l.b16 %v34
    %v163 = vunpack.c.l.b16 %v35
    %v164 = vunpack.c.l.b16 %v36
    %v165 = vunpack.c.l.b16 %v37
    %v166 = vunpack.c.l.b16 %v38
    %v167 = vunpack.c.l.b16 %v39
    %v168 = vunpack.c.l.b16 %v40
    %v169 = vunpack.c.l.b16 %v41
    %v170 = vunpack.c.l.b16 %v42
    %v171 = vunpack.c.l.b16 %v43
    %v172 = vunpack.c.l.b16 %v44
    %v173 = vunpack.c.l.b16 %v45
    %v174 = vunpack.c.l.b16 %v46
    %v175 = vpack.c.b16 %v160, %v159
    %v176 = vpack.c.b16 %v162, %v161
    %v177 = vpack.c.b16 %v164, %v163
    %v178 = vpack.c.b16 %v166, %v165
    %v179 = vpack.c.b16 %v168, %v167
    %v180 = vpack.c.b16 %v170, %v169
    %v181 = vpack.c.b16 %v172, %v171
    %v182 = vpack.c.b16 %v174, %v173
    %v185 = vunpack.c.l.b16 %v29
    %v186 = vunpack.c.l.b16 %v30
    %v187 = vpack.c.b16 %v186, %v185
    %vm188 = vcmask 80896
    %v190 = vsel %vm188, %v175, 0
    %v193 = vsel %vm188, %v176, 0
    %v196 = vsel %vm188, %v177, 0
    %v199 = vsel %vm188, %v178, 0
    %v202 = vsel %vm188, %v179, 0
    %v205 = vsel %vm188, %v180, 0
    %v208 = vsel %vm188, %v181, 0
    %v211 = vsel %vm188, %v182, 0
    %vm213 = vcmask 1044480
    %v215 = vsel %vm213, %v187, 0
    %217 = vmatpush.bf16.msra.mxu0 0
    %218 = vmatpush.bf16.msra.mxu0 0
    %219 = vmatpush.bf16.msra.mxu0 0
    %220 = vmatpush.bf16.msra.mxu0 0
    %221 = vmatpush.bf16.msra.mxu0 0
    %222 = vmatpush.bf16.msra.mxu0 0
    %223 = vmatpush.bf16.msra.mxu0 0
    %224 = vmatpush.bf16.msra.mxu0 %v215
    %225 = vmatmul.bf16.gmra.mxu0 %v190
    %v226 = vpop.f32.mrf.mxu0
    %v227 = vadd.f32 %v66, %v226
    %v228 = vpop.f32.mrf.mxu0
    %v229 = vadd.f32 %v71, %v228
    %230 = vmatmul.bf16.gmra.mxu0 %v193
    %v231 = vpop.f32.mrf.mxu0
    %v232 = vadd.f32 %v76, %v231
    %v233 = vpop.f32.mrf.mxu0
    %v234 = vadd.f32 %v81, %v233
    %235 = vmatmul.bf16.gmra.mxu0 %v196
    %v236 = vpop.f32.mrf.mxu0
    %v237 = vadd.f32 %v86, %v236
    %v238 = vpop.f32.mrf.mxu0
    %v239 = vadd.f32 %v91, %v238
    %240 = vmatmul.bf16.gmra.mxu0 %v199
    %v241 = vpop.f32.mrf.mxu0
    %v242 = vadd.f32 %v96, %v241
    %v243 = vpop.f32.mrf.mxu0
    %v244 = vadd.f32 %v101, %v243
    %245 = vmatmul.bf16.gmra.mxu0 %v202
    %v246 = vpop.f32.mrf.mxu0
    %v247 = vadd.f32 %v106, %v246
    %v248 = vpop.f32.mrf.mxu0
    %v249 = vadd.f32 %v111, %v248
    %250 = vmatmul.bf16.gmra.mxu0 %v205
    %v251 = vpop.f32.mrf.mxu0
    %v252 = vadd.f32 %v116, %v251
    %v253 = vpop.f32.mrf.mxu0
    %v254 = vadd.f32 %v121, %v253
    %255 = vmatmul.bf16.gmra.mxu0 %v208
    %v256 = vpop.f32.mrf.mxu0
    %v257 = vadd.f32 %v126, %v256
    %v258 = vpop.f32.mrf.mxu0
    %v259 = vadd.f32 %v131, %v258
    %260 = vmatmul.bf16.gmra.mxu0 %v211
    %v261 = vpop.f32.mrf.mxu0
    %v262 = vadd.f32 %v136, %v261
    %v263 = vpop.f32.mrf.mxu0
    %v264 = vadd.f32 %v141, %v263
    %265 = vdwg.mxu0
    %vm266 = vcmp.ge.f32.partialorder %v227, 0.0
    %vm267 = vcmp.ge.f32.partialorder %v229, 0.0
    %vm268 = vcmp.ge.f32.partialorder %v232, 0.0
    %vm269 = vcmp.ge.f32.partialorder %v234, 0.0
    %vm270 = vcmp.ge.f32.partialorder %v237, 0.0
    %vm271 = vcmp.ge.f32.partialorder %v239, 0.0
    %vm272 = vcmp.ge.f32.partialorder %v242, 0.0
    %vm273 = vcmp.ge.f32.partialorder %v244, 0.0
    %vm274 = vcmp.ge.f32.partialorder %v247, 0.0
    %vm275 = vcmp.ge.f32.partialorder %v249, 0.0
    %vm276 = vcmp.ge.f32.partialorder %v252, 0.0
    %vm277 = vcmp.ge.f32.partialorder %v254, 0.0
    %vm278 = vcmp.ge.f32.partialorder %v257, 0.0
    %vm279 = vcmp.ge.f32.partialorder %v259, 0.0
    %vm280 = vcmp.ge.f32.partialorder %v262, 0.0
    %vm281 = vcmp.ge.f32.partialorder %v264, 0.0
    %v282 = vmul.f32 %v227, 0.2
    %v283 = vmul.f32 %v229, 0.2
    %v284 = vmul.f32 %v232, 0.2
    %v285 = vmul.f32 %v234, 0.2
    %v286 = vmul.f32 %v237, 0.2
    %v287 = vmul.f32 %v239, 0.2
    %v288 = vmul.f32 %v242, 0.2
    %v289 = vmul.f32 %v244, 0.2
    %v290 = vmul.f32 %v247, 0.2
    %v291 = vmul.f32 %v249, 0.2
    %v292 = vmul.f32 %v252, 0.2
    %v293 = vmul.f32 %v254, 0.2
    %v294 = vmul.f32 %v257, 0.2
    %v295 = vmul.f32 %v259, 0.2
    %v296 = vmul.f32 %v262, 0.2
    %v297 = vmul.f32 %v264, 0.2
    %v298 = vsel %vm266, %v227, %v282
    %v299 = vsel %vm267, %v229, %v283
    %v300 = vsel %vm268, %v232, %v284
    %v301 = vsel %vm269, %v234, %v285
    %v302 = vsel %vm270, %v237, %v286
    %v303 = vsel %vm271, %v239, %v287
    %v304 = vsel %vm272, %v242, %v288
    %v305 = vsel %vm273, %v244, %v289
    %v306 = vsel %vm274, %v247, %v290
    %v307 = vsel %vm275, %v249, %v291
    %v308 = vsel %vm276, %v252, %v292
    %v309 = vsel %vm277, %v254, %v293
    %v310 = vsel %vm278, %v257, %v294
    %v311 = vsel %vm279, %v259, %v295
    %v312 = vsel %vm280, %v262, %v296
    %v313 = vsel %vm281, %v264, %v297
    %v314 = vld [vmem:[%s3] sm:$0xf]
    %v315 = vld [vmem:[%s3 + $0x4] sm:$0xf]
    %v316 = vld [vmem:[%s3 + $0x8] sm:$0xf]
    %v317 = vld [vmem:[%s3 + $0xc] sm:$0xf]
    %v318 = vld [vmem:[%s3 + $0x10] sm:$0xf]
    %v319 = vld [vmem:[%s3 + $0x14] sm:$0xf]
    %v320 = vld [vmem:[%s3 + $0x18] sm:$0xf]
    %v321 = vld [vmem:[%s3 + $0x1c] sm:$0xf]
    %v322 = vld [vmem:[%s3 + $0x20] sm:$0xf]
    %v323 = vld [vmem:[%s3 + $0x24] sm:$0xf]
    %v324 = vld [vmem:[%s3 + $0x28] sm:$0xf]
    %v325 = vld [vmem:[%s3 + $0x2c] sm:$0xf]
    %v326 = vld [vmem:[%s3 + $0x30] sm:$0xf]
    %v327 = vld [vmem:[%s3 + $0x34] sm:$0xf]
    %v328 = vld [vmem:[%s3 + $0x38] sm:$0xf]
    %v329 = vld [vmem:[%s3 + $0x3c] sm:$0xf]
    %v330 = vpack.c.bf16 %v299, %v298
    %v331 = vpack.c.bf16 %v301, %v300
    %v332 = vpack.c.bf16 %v303, %v302
    %v333 = vpack.c.bf16 %v305, %v304
    %v334 = vpack.c.bf16 %v307, %v306
    %v335 = vpack.c.bf16 %v309, %v308
    %v336 = vpack.c.bf16 %v311, %v310
    %v337 = vpack.c.bf16 %v313, %v312
    %v338 = vld [vmem:[%s4] sm:$0xff]
    %v339 = vld [vmem:[%s4 + $0x8] sm:$0xff]
    %v340 = vld [vmem:[%s4 + $0x10] sm:$0xff]
    %v341 = vld [vmem:[%s4 + $0x18] sm:$0xff]
    %v342 = vld [vmem:[%s4 + $0x20] sm:$0xff]
    %v343 = vld [vmem:[%s4 + $0x28] sm:$0xff]
    %v344 = vld [vmem:[%s4 + $0x30] sm:$0xff]
    %v345 = vld [vmem:[%s4 + $0x38] sm:$0xff]
    %v346 = vld [vmem:[%s4 + $0x40] sm:$0xff]
    %v347 = vld [vmem:[%s4 + $0x48] sm:$0xff]
    %v348 = vld [vmem:[%s4 + $0x50] sm:$0xff]
    %v349 = vld [vmem:[%s4 + $0x58] sm:$0xff]
    %v350 = vld [vmem:[%s4 + $0x60] sm:$0xff]
    %v351 = vld [vmem:[%s4 + $0x68] sm:$0xff]
    %v352 = vld [vmem:[%s4 + $0x70] sm:$0xff]
    %v353 = vld [vmem:[%s4 + $0x78] sm:$0xff]
    %355 = vset.pattern.permute.xlu0 0
    %356 = vperm.xlu0 %355, %v338
    %v357 = vpop.permute.xlu0 %356
    %360 = vset.pattern.permute.xlu0 0
    %361 = vperm.xlu0 %360, %v339
    %v362 = vpop.permute.xlu0 %361
    %365 = vset.pattern.permute.xlu0 0
    %366 = vperm.xlu0 %365, %v340
    %v367 = vpop.permute.xlu0 %366
    %370 = vset.pattern.permute.xlu0 0
    %371 = vperm.xlu0 %370, %v341
    %v372 = vpop.permute.xlu0 %371
    %375 = vset.pattern.permute.xlu0 0
    %376 = vperm.xlu0 %375, %v342
    %v377 = vpop.permute.xlu0 %376
    %380 = vset.pattern.permute.xlu0 0
    %381 = vperm.xlu0 %380, %v343
    %v382 = vpop.permute.xlu0 %381
    %385 = vset.pattern.permute.xlu0 0
    %386 = vperm.xlu0 %385, %v344
    %v387 = vpop.permute.xlu0 %386
    %390 = vset.pattern.permute.xlu0 0
    %391 = vperm.xlu0 %390, %v345
    %v392 = vpop.permute.xlu0 %391
    %395 = vset.pattern.permute.xlu0 0
    %396 = vperm.xlu0 %395, %v346
    %v397 = vpop.permute.xlu0 %396
    %400 = vset.pattern.permute.xlu0 0
    %401 = vperm.xlu0 %400, %v347
    %v402 = vpop.permute.xlu0 %401
    %405 = vset.pattern.permute.xlu0 0
    %406 = vperm.xlu0 %405, %v348
    %v407 = vpop.permute.xlu0 %406
    %410 = vset.pattern.permute.xlu0 0
    %411 = vperm.xlu0 %410, %v349
    %v412 = vpop.permute.xlu0 %411
    %415 = vset.pattern.permute.xlu0 0
    %416 = vperm.xlu0 %415, %v350
    %v417 = vpop.permute.xlu0 %416
    %420 = vset.pattern.permute.xlu0 0
    %421 = vperm.xlu0 %420, %v351
    %v422 = vpop.permute.xlu0 %421
    %425 = vset.pattern.permute.xlu0 0
    %426 = vperm.xlu0 %425, %v352
    %v427 = vpop.permute.xlu0 %426
    %430 = vset.pattern.permute.xlu0 0
    %431 = vperm.xlu0 %430, %v353
    %v432 = vpop.permute.xlu0 %431
    %v450 = vunpack.c.l.b16 %v314
    %v451 = vunpack.c.l.b16 %v315
    %v452 = vunpack.c.l.b16 %v316
    %v453 = vunpack.c.l.b16 %v317
    %v454 = vunpack.c.l.b16 %v318
    %v455 = vunpack.c.l.b16 %v319
    %v456 = vunpack.c.l.b16 %v320
    %v457 = vunpack.c.l.b16 %v321
    %v458 = vunpack.c.l.b16 %v322
    %v459 = vunpack.c.l.b16 %v323
    %v460 = vunpack.c.l.b16 %v324
    %v461 = vunpack.c.l.b16 %v325
    %v462 = vunpack.c.l.b16 %v326
    %v463 = vunpack.c.l.b16 %v327
    %v464 = vunpack.c.l.b16 %v328
    %v465 = vunpack.c.l.b16 %v329
    %v466 = vpack.c.b16 %v451, %v450
    %v467 = vpack.c.b16 %v453, %v452
    %v468 = vpack.c.b16 %v455, %v454
    %v469 = vpack.c.b16 %v457, %v456
    %v470 = vpack.c.b16 %v459, %v458
    %v471 = vpack.c.b16 %v461, %v460
    %v472 = vpack.c.b16 %v463, %v462
    %v473 = vpack.c.b16 %v465, %v464
    %482 = vmatpush.bf16.msra.mxu0 %v337
    %483 = vmatpush.bf16.msra.mxu0 %v336
    %484 = vmatpush.bf16.msra.mxu0 %v335
    %485 = vmatpush.bf16.msra.mxu0 %v334
    %486 = vmatpush.bf16.msra.mxu0 %v333
    %487 = vmatpush.bf16.msra.mxu0 %v332
    %488 = vmatpush.bf16.msra.mxu0 %v331
    %489 = vmatpush.bf16.msra.mxu0 %v330
    %490 = vmatmul.bf16.gmra.mxu0 %v466
    %v491 = vpop.f32.mrf.mxu0
    %v492 = vadd.f32 %v357, %v491
    %v493 = vpop.f32.mrf.mxu0
    %v494 = vadd.f32 %v362, %v493
    %495 = vmatmul.bf16.gmra.mxu0 %v467
    %v496 = vpop.f32.mrf.mxu0
    %v497 = vadd.f32 %v367, %v496
    %v498 = vpop.f32.mrf.mxu0
    %v499 = vadd.f32 %v372, %v498
    %500 = vmatmul.bf16.gmra.mxu0 %v468
    %v501 = vpop.f32.mrf.mxu0
    %v502 = vadd.f32 %v377, %v501
    %v503 = vpop.f32.mrf.mxu0
    %v504 = vadd.f32 %v382, %v503
    %505 = vmatmul.bf16.gmra.mxu0 %v469
    %v506 = vpop.f32.mrf.mxu0
    %v507 = vadd.f32 %v387, %v506
    %v508 = vpop.f32.mrf.mxu0
    %v509 = vadd.f32 %v392, %v508
    %510 = vmatmul.bf16.gmra.mxu0 %v470
    %v511 = vpop.f32.mrf.mxu0
    %v512 = vadd.f32 %v397, %v511
    %v513 = vpop.f32.mrf.mxu0
    %v514 = vadd.f32 %v402, %v513
    %515 = vmatmul.bf16.gmra.mxu0 %v471
    %v516 = vpop.f32.mrf.mxu0
    %v517 = vadd.f32 %v407, %v516
    %v518 = vpop.f32.mrf.mxu0
    %v519 = vadd.f32 %v412, %v518
    %520 = vmatmul.bf16.gmra.mxu0 %v472
    %v521 = vpop.f32.mrf.mxu0
    %v522 = vadd.f32 %v417, %v521
    %v523 = vpop.f32.mrf.mxu0
    %v524 = vadd.f32 %v422, %v523
    %525 = vmatmul.bf16.gmra.mxu0 %v473
    %v526 = vpop.f32.mrf.mxu0
    %v527 = vadd.f32 %v427, %v526
    %v528 = vpop.f32.mrf.mxu0
    %v529 = vadd.f32 %v432, %v528
    %530 = vdwg.mxu0
    %vm531 = vcmp.ge.f32.partialorder %v492, 0.0
    %vm532 = vcmp.ge.f32.partialorder %v494, 0.0
    %vm533 = vcmp.ge.f32.partialorder %v497, 0.0
    %vm534 = vcmp.ge.f32.partialorder %v499, 0.0
    %vm535 = vcmp.ge.f32.partialorder %v502, 0.0
    %vm536 = vcmp.ge.f32.partialorder %v504, 0.0
    %vm537 = vcmp.ge.f32.partialorder %v507, 0.0
    %vm538 = vcmp.ge.f32.partialorder %v509, 0.0
    %vm539 = vcmp.ge.f32.partialorder %v512, 0.0
    %vm540 = vcmp.ge.f32.partialorder %v514, 0.0
    %vm541 = vcmp.ge.f32.partialorder %v517, 0.0
    %vm542 = vcmp.ge.f32.partialorder %v519, 0.0
    %vm543 = vcmp.ge.f32.partialorder %v522, 0.0
    %vm544 = vcmp.ge.f32.partialorder %v524, 0.0
    %vm545 = vcmp.ge.f32.partialorder %v527, 0.0
    %vm546 = vcmp.ge.f32.partialorder %v529, 0.0
    %v547 = vmul.f32 %v492, 0.2
    %v548 = vmul.f32 %v494, 0.2
    %v549 = vmul.f32 %v497, 0.2
    %v550 = vmul.f32 %v499, 0.2
    %v551 = vmul.f32 %v502, 0.2
    %v552 = vmul.f32 %v504, 0.2
    %v553 = vmul.f32 %v507, 0.2
    %v554 = vmul.f32 %v509, 0.2
    %v555 = vmul.f32 %v512, 0.2
    %v556 = vmul.f32 %v514, 0.2
    %v557 = vmul.f32 %v517, 0.2
    %v558 = vmul.f32 %v519, 0.2
    %v559 = vmul.f32 %v522, 0.2
    %v560 = vmul.f32 %v524, 0.2
    %v561 = vmul.f32 %v527, 0.2
    %v562 = vmul.f32 %v529, 0.2
    %v563 = vsel %vm531, %v492, %v547
    %v564 = vsel %vm532, %v494, %v548
    %v565 = vsel %vm533, %v497, %v549
    %v566 = vsel %vm534, %v499, %v550
    %v567 = vsel %vm535, %v502, %v551
    %v568 = vsel %vm536, %v504, %v552
    %v569 = vsel %vm537, %v507, %v553
    %v570 = vsel %vm538, %v509, %v554
    %v571 = vsel %vm539, %v512, %v555
    %v572 = vsel %vm540, %v514, %v556
    %v573 = vsel %vm541, %v517, %v557
    %v574 = vsel %vm542, %v519, %v558
    %v575 = vsel %vm543, %v522, %v559
    %v576 = vsel %vm544, %v524, %v560
    %v577 = vsel %vm545, %v527, %v561
    %v578 = vsel %vm546, %v529, %v562
    %v579 = vld [vmem:[%s5] sm:$0xff]
    %v580 = vld [vmem:[%s5 + $0x8] sm:$0xff]
    %v581 = vld [vmem:[%s5 + $0x10] sm:$0xff]
    %v582 = vld [vmem:[%s5 + $0x18] sm:$0xff]
    %v583 = vld [vmem:[%s5 + $0x20] sm:$0xff]
    %v584 = vld [vmem:[%s5 + $0x28] sm:$0xff]
    %v585 = vld [vmem:[%s5 + $0x30] sm:$0xff]
    %v586 = vld [vmem:[%s5 + $0x38] sm:$0xff]
    %v587 = vld [vmem:[%s5 + $0x40] sm:$0xff]
    %v588 = vld [vmem:[%s5 + $0x48] sm:$0xff]
    %v589 = vld [vmem:[%s5 + $0x50] sm:$0xff]
    %v590 = vld [vmem:[%s5 + $0x58] sm:$0xff]
    %v591 = vld [vmem:[%s5 + $0x60] sm:$0xff]
    %v592 = vld [vmem:[%s5 + $0x68] sm:$0xff]
    %v593 = vld [vmem:[%s5 + $0x70] sm:$0xff]
    %v594 = vld [vmem:[%s5 + $0x78] sm:$0xff]
    %596 = vset.pattern.permute.xlu0 0
    %597 = vperm.xlu0 %596, %v579
    %v598 = vpop.permute.xlu0 %597
    %601 = vset.pattern.permute.xlu0 0
    %602 = vperm.xlu0 %601, %v580
    %v603 = vpop.permute.xlu0 %602
    %606 = vset.pattern.permute.xlu0 0
    %607 = vperm.xlu0 %606, %v581
    %v608 = vpop.permute.xlu0 %607
    %611 = vset.pattern.permute.xlu0 0
    %612 = vperm.xlu0 %611, %v582
    %v613 = vpop.permute.xlu0 %612
    %616 = vset.pattern.permute.xlu0 0
    %617 = vperm.xlu0 %616, %v583
    %v618 = vpop.permute.xlu0 %617
    %621 = vset.pattern.permute.xlu0 0
    %622 = vperm.xlu0 %621, %v584
    %v623 = vpop.permute.xlu0 %622
    %626 = vset.pattern.permute.xlu0 0
    %627 = vperm.xlu0 %626, %v585
    %v628 = vpop.permute.xlu0 %627
    %631 = vset.pattern.permute.xlu0 0
    %632 = vperm.xlu0 %631, %v586
    %v633 = vpop.permute.xlu0 %632
    %636 = vset.pattern.permute.xlu0 0
    %637 = vperm.xlu0 %636, %v587
    %v638 = vpop.permute.xlu0 %637
    %641 = vset.pattern.permute.xlu0 0
    %642 = vperm.xlu0 %641, %v588
    %v643 = vpop.permute.xlu0 %642
    %646 = vset.pattern.permute.xlu0 0
    %647 = vperm.xlu0 %646, %v589
    %v648 = vpop.permute.xlu0 %647
    %651 = vset.pattern.permute.xlu0 0
    %652 = vperm.xlu0 %651, %v590
    %v653 = vpop.permute.xlu0 %652
    %656 = vset.pattern.permute.xlu0 0
    %657 = vperm.xlu0 %656, %v591
    %v658 = vpop.permute.xlu0 %657
    %661 = vset.pattern.permute.xlu0 0
    %662 = vperm.xlu0 %661, %v592
    %v663 = vpop.permute.xlu0 %662
    %666 = vset.pattern.permute.xlu0 0
    %667 = vperm.xlu0 %666, %v593
    %v668 = vpop.permute.xlu0 %667
    %671 = vset.pattern.permute.xlu0 0
    %672 = vperm.xlu0 %671, %v594
    %v673 = vpop.permute.xlu0 %672
    %v675 = vmul.f32 %v598, %v563
    %v676 = vmul.f32 %v603, %v564
    %v677 = vmul.f32 %v608, %v565
    %v678 = vmul.f32 %v613, %v566
    %v679 = vmul.f32 %v618, %v567
    %v680 = vmul.f32 %v623, %v568
    %v681 = vmul.f32 %v628, %v569
    %v682 = vmul.f32 %v633, %v570
    %v683 = vmul.f32 %v638, %v571
    %v684 = vmul.f32 %v643, %v572
    %v685 = vmul.f32 %v648, %v573
    %v686 = vmul.f32 %v653, %v574
    %v687 = vmul.f32 %v658, %v575
    %v688 = vmul.f32 %v663, %v576
    %v689 = vmul.f32 %v668, %v577
    %v690 = vmul.f32 %v673, %v578
    %v691 = vadd.f32 %v675, %v676
    %v692 = vadd.f32 %v691, %v677
    %v693 = vadd.f32 %v692, %v678
    %v694 = vadd.f32 %v693, %v679
    %v695 = vadd.f32 %v694, %v680
    %v696 = vadd.f32 %v695, %v681
    %v697 = vadd.f32 %v696, %v682
    %v698 = vadd.f32 %v697, %v683
    %v699 = vadd.f32 %v698, %v684
    %v700 = vadd.f32 %v699, %v685
    %v701 = vadd.f32 %v700, %v686
    %v702 = vadd.f32 %v701, %v687
    %v703 = vadd.f32 %v702, %v688
    %v704 = vadd.f32 %v703, %v689
    %v705 = vadd.f32 %v704, %v690
    %v706 = vrot.slane %v705, 4
    %v707 = vadd.f32 %v705, %v706
    %v708 = vrot.slane %v707, 2
    %v709 = vadd.f32 %v707, %v708
    %v710 = vrot.slane %v709, 1
    %v711 = vadd.f32 %v709, %v710
    %s712 = sld [smem:[#allocation2]]
    %v713 = vstv %s712
    %v714 = vadd.f32 %v711, %v713
    %v715 = vxor.u32 %v714, 2147483648
    %v716 = vmul.f32 %v715, 1.442695
    %v717 = vpow.pop %v716
    %v718 = vadd.f32 %v717, 1.0
    %v719 = vrcp.pop %v718
    %v720 = vmul.f32 %v718, %v719
    %v721 = vsub.f32 1.0, %v720
    %v722 = vmul.f32 %v719, %v721
    %v723 = vadd.f32 %v719, %v722
    %vm724 = vweird.f32 %v718
    %vm725 = vweird.f32 %v719
    %vm726 = vmor %vm724, %vm725
    %v727 = vsel %vm726, %v719, %v723
    %v728 = vand.u32 2147483647, %v718
    %vm729 = vcmp.eq.f32.partialorder %v728, 8.507059e+37
    %v730 = vand.u32 %v718, 2147483648
    %v731 = vor.u32 1.1754944e-38, %v730
    %v732 = vsel %vm729, %v731, %v727
    %v733 = vmul.f32 1.0, %v732
    %vm734 = vcmask 1040384
    %v735 = vsel %vm734, %v714, %v733
    %736 = vst [vmem:[#allocation3] sm:$0x3] %v735
    // Predicated region
    $region30: #{tpu_custom_call.1} parent=1 // pred_check
      _
    $region31: #{tpu_custom_call.1} parent=1 // pred_check_branch
      %738 = sbr.rel (0) target = $region33
    $region32: #{tpu_custom_call.1} parent=1 // pred_region
      %740 = vsyncadd [#allocation4], 0
      %s742 = sshll.u32 [#allocation3], 4
      %s743 = int_to_ptr.vmem [resolvable:$true] %s742
      %s744 = sshll.u32 %s7, 4
      %s745 = int_to_ptr.hbm [resolvable:$true] %s744
      %747 = dma.vmem_to_hbm [thread:$0]  %s743, 32, %s745, [#allocation4]
    $region33: #{tpu_custom_call.1} parent=1 // pred_fallthru
      _
    // Predicated region
    $region34: #{tpu_custom_call.1} parent=1 // pred_check
      _
    $region35: #{tpu_custom_call.1} parent=1 // pred_check_branch
      %749 = sbr.rel (0) target = $region37
    $region36: #{tpu_custom_call.1} parent=1 // pred_region
      %751 = dma.done [#allocation4], 32
    $region37: #{tpu_custom_call.1} parent=1 // pred_fallthru
      _
    %752 = vsyncpa [#allocation4], 1

</llo_original>
